<compile_context>
chip_gen: v5e
topology: v5e:2x2
jax: 0.10.0
libtpu: 0.0.40
codegen_flags: <defaults>
</compile_context>

<pallas_src>
import functools

import jax
import jax.numpy as jnp
from jax.experimental import pallas as pl
from jax.experimental.pallas import tpu as pltpu

_EPS = 1e-6  # matches torch.nn.functional.pairwise_distance default eps


def _triplet_loss_kernel(margin_ref, a_ref, p_ref, n_ref, o_ref, *, block_rows, batch):
    i = pl.program_id(0)

    # Upcast once right after the loads (bf16 inputs compute in f32; fast path on v5e too).
    a = a_ref[...].astype(jnp.float32)
    p = p_ref[...].astype(jnp.float32)
    n = n_ref[...].astype(jnp.float32)

    # F.pairwise_distance(x1, x2, p=2, eps=1e-6) = || x1 - x2 + eps ||_2 over last dim.
    dp = a - p + _EPS
    dn = a - n + _EPS
    pos_dist = jnp.sqrt(jnp.sum(dp * dp, axis=-1, keepdims=True))  # (TB, 1)
    neg_dist = jnp.sqrt(jnp.sum(dn * dn, axis=-1, keepdims=True))  # (TB, 1)

    hinge = jnp.maximum(pos_dist - neg_dist + margin_ref[0], 0.0)  # (TB, 1)

    # Mask rows past the true batch size (ragged last tile reads padded/garbage rows).
    row = i * block_rows + jax.lax.broadcasted_iota(jnp.int32, hinge.shape, 0)
    hinge = jnp.where(row < batch, hinge, 0.0)

    # Per-tile partial sum, broadcast across the 128-lane output row (lane-dense store).
    partial = jnp.sum(hinge)
    o_ref[...] = jnp.full(o_ref.shape, partial, dtype=o_ref.dtype)


def _pick_block_rows(batch, dim, itemsize):
    # ~2 MiB per input block -> 3 inputs x 2 pipeline buffers ~ 12 MiB VMEM (fits v5e/v6e/v7x
    # default scoped VMEM). Rows kept a multiple of 16 (sublane-friendly for f32 and bf16).
    target_bytes = 2 * 1024 * 1024
    rows = target_bytes // max(1, dim * itemsize)
    rows = max(16, (rows // 16) * 16)
    rows = min(rows, 8192)
    if batch <= rows:
        return batch  # single full-extent block (no divisibility constraint)
    return rows


def triplet_loss(anchor, positive, negative, margin, *, block_rows=None):
    """anchor/positive/negative: (B, D) float arrays. Returns scalar f32 loss."""
    B, D = anchor.shape
    itemsize = jnp.dtype(anchor.dtype).itemsize
    tb = block_rows if block_rows is not None else _pick_block_rows(B, D, itemsize)
    tb = min(tb, B)  # if tb < B it must be a multiple of 8 (16 for bf16); auto-pick satisfies this
    num_tiles = pl.cdiv(B, tb)

    margin_arr = jnp.asarray([margin], dtype=jnp.float32)
    kernel = functools.partial(_triplet_loss_kernel, block_rows=tb, batch=B)

    partials = pl.pallas_call(
        kernel,
        out_shape=jax.ShapeDtypeStruct((num_tiles, 1, 128), jnp.float32),
        grid=(num_tiles,),
        in_specs=[
            pl.BlockSpec(memory_space=pltpu.MemorySpace.SMEM),  # margin scalar
            pl.BlockSpec((tb, D), lambda i: (i, 0)),
            pl.BlockSpec((tb, D), lambda i: (i, 0)),
            pl.BlockSpec((tb, D), lambda i: (i, 0)),
        ],
        out_specs=pl.BlockSpec((1, 1, 128), lambda i: (i, 0, 0)),
        compiler_params=pltpu.CompilerParams(
            dimension_semantics=("parallel",),
        ),
    )(margin_arr, anchor, positive, negative)

    # Finish the mean in JAX (tiny reduction over num_tiles).
    return jnp.sum(partials[:, 0, 0]) / B


def triplet_loss_ref(anchor, positive, negative, margin):
    """Pure-JAX reference mirroring the PyTorch forward."""
    pos = jnp.sqrt(jnp.sum((anchor - positive + _EPS) ** 2, axis=-1))
    neg = jnp.sqrt(jnp.sum((anchor - negative + _EPS) ** 2, axis=-1))
    return jnp.mean(jnp.maximum(pos - neg + margin, 0.0))


if __name__ == "__main__":
    margin = 0.2  # cfg['loss']['margin'] — deterministic synthetic config
    key = jax.random.PRNGKey(0)
    k = jax.random.split(key, 6)

    # Case 1: small single-tile problem (B=8, D=128).
    B, D = 8, 128
    anchor = jax.random.normal(k[0], (B, D), dtype=jnp.float32)
    positive = jax.random.normal(k[1], (B, D), dtype=jnp.float32)
    negative = jax.random.normal(k[2], (B, D), dtype=jnp.float32)
    loss = triplet_loss(anchor, positive, negative, margin)
    jax.block_until_ready(loss)
    ref = triplet_loss_ref(anchor, positive, negative, margin)
    assert jnp.allclose(loss, ref, rtol=1e-5, atol=1e-5), (loss, ref)

    # Case 2: multi-tile path with a ragged last tile (forces tiling + row masking).
    B2 = 40
    anchor2 = jax.random.normal(k[3], (B2, D), dtype=jnp.float32)
    positive2 = jax.random.normal(k[4], (B2, D), dtype=jnp.float32)
    negative2 = jax.random.normal(k[5], (B2, D), dtype=jnp.float32)
    loss2 = triplet_loss(anchor2, positive2, negative2, margin, block_rows=16)
    jax.block_until_ready(loss2)
    ref2 = triplet_loss_ref(anchor2, positive2, negative2, margin)
    assert jnp.allclose(loss2, ref2, rtol=1e-5, atol=1e-5), (loss2, ref2)

    print("KERNEL_OK")
</pallas_src>

<mosaic_0001>
module attributes {stable_mosaic.version = 11 : i64} {
  func.func @_triplet_loss_kernel(%arg0: i32, %arg1: memref<1xf32, #tpu.memory_space<smem>>, %arg2: memref<8x128xf32, #tpu.memory_space<vmem>>, %arg3: memref<8x128xf32, #tpu.memory_space<vmem>>, %arg4: memref<8x128xf32, #tpu.memory_space<vmem>>, %arg5: memref<1x1x128xf32, #tpu.memory_space<vmem>>) attributes {dimension_semantics = [#tpu.dimension_semantics<parallel>], iteration_bounds = array<i64: 1>, scalar_prefetch = 0 : i64, scratch_operands = 0 : i64, tpu.core_type = #tpu.core_type<tc>, window_params = [{transform_indices = @transform_0, window_bounds = array<i64: 1>}, {transform_indices = @transform_1, window_bounds = array<i64: 8, 128>}, {transform_indices = @transform_2, window_bounds = array<i64: 8, 128>}, {transform_indices = @transform_3, window_bounds = array<i64: 8, 128>}, {transform_indices = @transform_4, window_bounds = array<i64: 1, 1, 128>}]} {
    %c0 = arith.constant 0 : index
    %c0_0 = arith.constant 0 : index
    %0 = vector.load %arg2[%c0, %c0_0] : memref<8x128xf32, #tpu.memory_space<vmem>>, vector<8x128xf32>
    %c0_1 = arith.constant 0 : index
    %c0_2 = arith.constant 0 : index
    %1 = vector.load %arg3[%c0_1, %c0_2] : memref<8x128xf32, #tpu.memory_space<vmem>>, vector<8x128xf32>
    %c0_3 = arith.constant 0 : index
    %c0_4 = arith.constant 0 : index
    %2 = vector.load %arg4[%c0_3, %c0_4] : memref<8x128xf32, #tpu.memory_space<vmem>>, vector<8x128xf32>
    %3 = arith.subf %0, %1 : vector<8x128xf32>
    %cst = arith.constant 9.99999997E-7 : f32
    %4 = vector.broadcast %cst : f32 to vector<8x128xf32>
    %5 = arith.addf %3, %4 : vector<8x128xf32>
    %6 = arith.subf %0, %2 : vector<8x128xf32>
    %cst_5 = arith.constant 9.99999997E-7 : f32
    %7 = vector.broadcast %cst_5 : f32 to vector<8x128xf32>
    %8 = arith.addf %6, %7 : vector<8x128xf32>
    %9 = arith.mulf %5, %5 : vector<8x128xf32>
    %cst_6 = arith.constant dense<0.000000e+00> : vector<8xf32>
    %10 = vector.multi_reduction <add>, %9, %cst_6 [1] : vector<8x128xf32> to vector<8xf32>
    %11 = vector.shape_cast %10 : vector<8xf32> to vector<8x1xf32>
    %12 = math.sqrt %11 : vector<8x1xf32>
    %13 = arith.mulf %8, %8 : vector<8x128xf32>
    %cst_7 = arith.constant dense<0.000000e+00> : vector<8xf32>
    %14 = vector.multi_reduction <add>, %13, %cst_7 [1] : vector<8x128xf32> to vector<8xf32>
    %15 = vector.shape_cast %14 : vector<8xf32> to vector<8x1xf32>
    %16 = math.sqrt %15 : vector<8x1xf32>
    %17 = arith.subf %12, %16 : vector<8x1xf32>
    %c0_8 = arith.constant 0 : index
    %18 = memref.load %arg1[%c0_8] : memref<1xf32, #tpu.memory_space<smem>>
    %19 = vector.broadcast %18 : f32 to vector<8x1xf32>
    %20 = arith.addf %17, %19 : vector<8x1xf32>
    %cst_9 = arith.constant 0.000000e+00 : f32
    %21 = vector.broadcast %cst_9 : f32 to vector<8x1xf32>
    %22 = arith.maximumf %20, %21 : vector<8x1xf32>
    %c8_i32 = arith.constant 8 : i32
    %23 = arith.muli %arg0, %c8_i32 : i32
    %24 = tpu.iota {dimensions = array<i32: 0>} : vector<8x1xi32>
    %25 = vector.broadcast %23 : i32 to vector<8x1xi32>
    %26 = arith.addi %25, %24 : vector<8x1xi32>
    %c8_i32_10 = arith.constant 8 : i32
    %27 = vector.broadcast %c8_i32_10 : i32 to vector<8x1xi32>
    %28 = arith.cmpi slt, %26, %27 : vector<8x1xi32>
    %cst_11 = arith.constant 0.000000e+00 : f32
    %29 = vector.broadcast %cst_11 : f32 to vector<8x1xf32>
    %30 = arith.select %28, %22, %29 : vector<8x1xi1>, vector<8x1xf32>
    %31 = vector.shape_cast %30 : vector<8x1xf32> to vector<1x8x1xf32>
    %cst_12 = arith.constant dense<0.000000e+00> : vector<1xf32>
    %32 = vector.multi_reduction <add>, %31, %cst_12 [1, 2] : vector<1x8x1xf32> to vector<1xf32>
    %33 = vector.shape_cast %32 : vector<1xf32> to vector<1x1x1xf32>
    %34 = vector.extract %33[0, 0, 0] : f32 from vector<1x1x1xf32>
    %35 = vector.broadcast %34 : f32 to vector<1x1x128xf32>
    %c0_13 = arith.constant 0 : index
    %c0_14 = arith.constant 0 : index
    %c0_15 = arith.constant 0 : index
    %36 = vector.load %arg5[%c0_13, %c0_14, %c0_15] : memref<1x1x128xf32, #tpu.memory_space<vmem>>, vector<1x1x128xf32>
    tpu.vector_store %arg5[%c0_13, %c0_14, %c0_15], %35 {strides = array<i32>} : memref<1x1x128xf32, #tpu.memory_space<vmem>>, vector<1x1x128xf32>,
    return
  }
  func.func @transform_0(%arg0: i32) -> i32 {
    %c0_i32 = arith.constant 0 : i32
    %c0_i32_0 = arith.constant 0 : i32
    return %c0_i32 : i32
  }
  func.func @transform_1(%arg0: i32) -> (i32, i32) {
    %c0_i32 = arith.constant 0 : i32
    %c0_i32_0 = arith.constant 0 : i32
    return %arg0, %c0_i32 : i32, i32
  }
  func.func @transform_2(%arg0: i32) -> (i32, i32) {
    %c0_i32 = arith.constant 0 : i32
    %c0_i32_0 = arith.constant 0 : i32
    return %arg0, %c0_i32 : i32, i32
  }
  func.func @transform_3(%arg0: i32) -> (i32, i32) {
    %c0_i32 = arith.constant 0 : i32
    %c0_i32_0 = arith.constant 0 : i32
    return %arg0, %c0_i32 : i32, i32
  }
  func.func @transform_4(%arg0: i32) -> (i32, i32, i32) {
    %c0_i32 = arith.constant 0 : i32
    %c0_i32_0 = arith.constant 0 : i32
    %c0_i32_1 = arith.constant 0 : i32
    return %arg0, %c0_i32, %c0_i32_0 : i32, i32, i32
  }
}

</mosaic_0001>

<llo_original>
// kernel: tpu_custom_call.1
$region0: #{tpu_custom_call.1}
  #allocation0 [shape = 'u32[]', space=smem, size = 0x4, offset = 0x4, fixed_abs, tag = 'smem constant byte address 0x4 - core index']
  #allocation1 [shape = 'u32[72,128]{1,0:T(1,128)}', space=vmem, size = 0x9000, scoped, tag = 'internal scratch']
  #allocation2 [shape = 'f32[1]{0:T(128)S(6)}', space=smem, size = 0x200, scoped, tag = 'scoped memory for tpu_custom_call.1']
  %s0 = inlined_call_operand.<no memory space> [shape: f32[1], index: 0, kind: input, shape index: {}]
  %s1 = inlined_call_operand.hbm [shape: f32[8,128], index: 1, kind: input, shape index: {}]
  %s2 = inlined_call_operand.hbm [shape: f32[8,128], index: 2, kind: input, shape index: {}]
  %s3 = inlined_call_operand.hbm [shape: f32[8,128], index: 3, kind: input, shape index: {}]
  %s4 = inlined_call_operand.hbm [shape: f32[1,1,128], index: 4, kind: output, shape index: {}]
  %s5 = sld [smem:[#allocation0]]
  $region38: #{tpu_custom_call.1} parent=0
    _
  %s7 = ssub.s32 1, %s5
  %s8 = scalar_select 0, %s7, %s5
  %9 = sst [smem:[#allocation2]] %s0
  $region1: #{tpu_custom_call.1} parent=0
    #allocation3 [shape = 'u8[4096]{0}', space=vmem, size = 0x1000, scoped, tag = 'input window, operand 1, single buffered']
    #allocation4 [shape = 's32[1]{0}', space=sflag, size = 0x4, scoped, tag = 'scoped memory for tpu_custom_call.1']
    #allocation5 [shape = 's32[1]{0}', space=sflag, size = 0x4, scoped, tag = 'scoped memory for tpu_custom_call.1']
    #allocation6 [shape = 'u8[4096]{0}', space=vmem, size = 0x1000, scoped, tag = 'input window, operand 2, single buffered']
    #allocation7 [shape = 's32[1]{0}', space=sflag, size = 0x4, scoped, tag = 'scoped memory for tpu_custom_call.1']
    #allocation8 [shape = 'u8[4096]{0}', space=vmem, size = 0x1000, scoped, tag = 'input window, operand 3, single buffered']
    #allocation9 [shape = 'u8[512]{0}', space=vmem, size = 0x400, scoped, tag = 'output window, operand 0, single buffered']
    %10 = vsyncpa [#allocation4], 0
    %11 = vsyncpa [#allocation7], 0
    %12 = vsyncpa [#allocation5], 0
    // Predicated region
    $region2: #{tpu_custom_call.1} parent=1 // pred_check
      _
    $region3: #{tpu_custom_call.1} parent=1 // pred_check_branch
      %14 = sbr.rel (0) target = $region5
    $region4: #{tpu_custom_call.1} parent=1 // pred_region
      _
    $region5: #{tpu_custom_call.1} parent=1 // pred_fallthru
      _
    // Predicated region
    $region6: #{tpu_custom_call.1} parent=1 // pred_check
      _
    $region7: #{tpu_custom_call.1} parent=1 // pred_check_branch
      %16 = sbr.rel (0) target = $region9
    $region8: #{tpu_custom_call.1} parent=1 // pred_region
      %18 = vsyncadd [#allocation4], 0
      %s20 = sshll.u32 %s1, 4
      %s21 = int_to_ptr.hbm [resolvable:$true] %s20
      %s22 = sshll.u32 [#allocation3], 4
      %s23 = int_to_ptr.vmem [resolvable:$true] %s22
      %25 = dma.hbm_to_vmem [thread:$0]  %s21, 128, %s23, [#allocation4]
    $region9: #{tpu_custom_call.1} parent=1 // pred_fallthru
      _
    // Predicated region
    $region10: #{tpu_custom_call.1} parent=1 // pred_check
      _
    $region11: #{tpu_custom_call.1} parent=1 // pred_check_branch
      %27 = sbr.rel (0) target = $region13
    $region12: #{tpu_custom_call.1} parent=1 // pred_region
      %29 = vsyncadd [#allocation7], 0
      %s31 = sshll.u32 %s2, 4
      %s32 = int_to_ptr.hbm [resolvable:$true] %s31
      %s33 = sshll.u32 [#allocation6], 4
      %s34 = int_to_ptr.vmem [resolvable:$true] %s33
      %36 = dma.hbm_to_vmem [thread:$0]  %s32, 128, %s34, [#allocation7]
    $region13: #{tpu_custom_call.1} parent=1 // pred_fallthru
      _
    // Predicated region
    $region14: #{tpu_custom_call.1} parent=1 // pred_check
      _
    $region15: #{tpu_custom_call.1} parent=1 // pred_check_branch
      %38 = sbr.rel (0) target = $region17
    $region16: #{tpu_custom_call.1} parent=1 // pred_region
      %40 = vsyncadd [#allocation7], 0
      %s42 = sshll.u32 %s3, 4
      %s43 = int_to_ptr.hbm [resolvable:$true] %s42
      %s44 = sshll.u32 [#allocation8], 4
      %s45 = int_to_ptr.vmem [resolvable:$true] %s44
      %47 = dma.hbm_to_vmem [thread:$0]  %s43, 128, %s45, [#allocation7]
    $region17: #{tpu_custom_call.1} parent=1 // pred_fallthru
      _
    // Predicated region
    $region18: #{tpu_custom_call.1} parent=1 // pred_check
      _
    $region19: #{tpu_custom_call.1} parent=1 // pred_check_branch
      %49 = sbr.rel (0) target = $region21
    $region20: #{tpu_custom_call.1} parent=1 // pred_region
      %51 = dma.done [#allocation4], 128
    $region21: #{tpu_custom_call.1} parent=1 // pred_fallthru
      _
    // Predicated region
    $region22: #{tpu_custom_call.1} parent=1 // pred_check
      _
    $region23: #{tpu_custom_call.1} parent=1 // pred_check_branch
      %53 = sbr.rel (0) target = $region25
    $region24: #{tpu_custom_call.1} parent=1 // pred_region
      %55 = dma.done [#allocation7], 128
    $region25: #{tpu_custom_call.1} parent=1 // pred_fallthru
      _
    // Predicated region
    $region26: #{tpu_custom_call.1} parent=1 // pred_check
      _
    $region27: #{tpu_custom_call.1} parent=1 // pred_check_branch
      %57 = sbr.rel (0) target = $region29
    $region28: #{tpu_custom_call.1} parent=1 // pred_region
      %59 = dma.done [#allocation7], 128
    $region29: #{tpu_custom_call.1} parent=1 // pred_fallthru
      _
    %v60 = vld [vmem:[#allocation3] sm:$0xff]
    %v61 = vld [vmem:[#allocation6] sm:$0xff]
    %v62 = vld [vmem:[#allocation8] sm:$0xff]
    %v63 = vsub.f32 %v60, %v61
    %v64 = vadd.f32 %v63, 1e-06
    %v65 = vsub.f32 %v60, %v62
    %v66 = vadd.f32 %v65, 1e-06
    %v67 = vmul.f32 %v64, %v64
    %68 = vadd.xlane.f32.xlu0 %v67
    %v69 = vpop.xlane.xlu0 %68
    %v70 = vrsqrt.pop %v69
    %v71 = vmul.f32 %v70, %v69
    %v72 = vmul.f32 %v71, %v70
    %v73 = vmul.f32 0.5, %v72
    %v74 = vsub.f32 1.5, %v73
    %v75 = vmul.f32 %v70, %v74
    %v76 = vmul.f32 %v69, %v75
    %vm77 = vcmp.eq.f32.partialorder %v69, inf
    %v78 = vsel %vm77, %v69, %v76
    %vm79 = vcmp.eq.f32.partialorder %v69, 0.0
    %v80 = vand.u32 %v69, 2147483648
    %v81 = vsel %vm79, %v80, %v78
    %v82 = vmul.f32 %v66, %v66
    %83 = vadd.xlane.f32.xlu0 %v82
    %v84 = vpop.xlane.xlu0 %83
    %v85 = vrsqrt.pop %v84
    %v86 = vmul.f32 %v85, %v84
    %v87 = vmul.f32 %v86, %v85
    %v88 = vmul.f32 0.5, %v87
    %v89 = vsub.f32 1.5, %v88
    %v90 = vmul.f32 %v85, %v89
    %v91 = vmul.f32 %v84, %v90
    %vm92 = vcmp.eq.f32.partialorder %v84, inf
    %v93 = vsel %vm92, %v84, %v91
    %vm94 = vcmp.eq.f32.partialorder %v84, 0.0
    %v95 = vand.u32 %v84, 2147483648
    %v96 = vsel %vm94, %v95, %v93
    %v97 = vsub.f32 %v81, %v96
    %s98 = sld [smem:[#allocation2]]
    %v99 = vstv %s98
    %v100 = vadd.f32 %v97, %v99
    %v101 = vmax.f32 %v100, 0.0
    %s102 = smul.u32 0, 8
    %v103 = vlaneseq
    %v104 = vshrl.u32 %v103, 7
    %v105 = vstv %s102
    %v106 = vadd.s32 %v105, %v104
    %vm107 = vcmp.lt.s32.totalorder %v106, 8
    %v108 = vsel %vm107, %v101, 0.0
    %vm109 = vcmask 7168
    %v110 = vsel %vm109, %v108, 0.0
    %111 = vadd.xlane.f32.xlu0 %v110
    %v112 = vpop.xlane.xlu0 %111
    %v113 = vrot.slane %v112, 4
    %v114 = vadd.f32 %v112, %v113
    %v115 = vrot.slane %v114, 2
    %v116 = vadd.f32 %v114, %v115
    %v117 = vrot.slane %v116, 1
    %v118 = vadd.f32 %v116, %v117
    %s119 = vtos %v118
    %v120 = vstv %s119
    %121 = vst [vmem:[#allocation9] sm:$0x1] %v120
    // Predicated region
    $region30: #{tpu_custom_call.1} parent=1 // pred_check
      _
    $region31: #{tpu_custom_call.1} parent=1 // pred_check_branch
      %123 = sbr.rel (0) target = $region33
    $region32: #{tpu_custom_call.1} parent=1 // pred_region
      %125 = vsyncadd [#allocation5], 0
      %s127 = sshll.u32 [#allocation9], 4
      %s128 = int_to_ptr.vmem [resolvable:$true] %s127
      %s129 = sshll.u32 %s4, 4
      %s130 = int_to_ptr.hbm [resolvable:$true] %s129
      %132 = dma.vmem_to_hbm [thread:$0]  %s128, 16, %s130, [#allocation5]
    $region33: #{tpu_custom_call.1} parent=1 // pred_fallthru
      _
    // Predicated region
    $region34: #{tpu_custom_call.1} parent=1 // pred_check
      _
    $region35: #{tpu_custom_call.1} parent=1 // pred_check_branch
      %134 = sbr.rel (0) target = $region37
    $region36: #{tpu_custom_call.1} parent=1 // pred_region
      %136 = dma.done [#allocation5], 16
    $region37: #{tpu_custom_call.1} parent=1 // pred_fallthru
      _
    %137 = vsyncpa [#allocation4], 1
    %138 = vsyncpa [#allocation7], 1
    %139 = vsyncpa [#allocation5], 1

</llo_original>
